<compile_context>
chip_gen: v7x
topology: tpu7x:2x2x1
jax: 0.10.0
libtpu: 0.0.40
codegen_flags: <defaults>
</compile_context>

<pallas_src>
import jax
import jax.numpy as jnp
from jax import lax
from jax.experimental import pallas as pl
from jax.experimental.pallas import tpu as pltpu

HIDDEN = 32  # FF_hidden1 == FF_hidden2 == FF_output == 32 in the PyTorch module

# (M, K) x (O, K) -> (M, O), i.e. x @ W^T with W in PyTorch (out, in) layout.
_DN_NT = (((1,), (1,)), ((), ()))


def ff_global_kernel(x_ref, wa_ref, ba_ref, w2_ref, b2_ref, w3_ref, b3_ref, o_ref):
    x = x_ref[...]

    # Stage 1 (fused): one MXU dot computes both
    #   layer-1 pre-activation (lanes [0, 32))  and
    #   shortcut output        (lanes [32, 64)).
    a = lax.dot_general(x, wa_ref[...], _DN_NT,
                        preferred_element_type=jnp.float32)
    a = a + ba_ref[...]                      # single fused (1, 64) bias row
    h = jnp.maximum(a[:, :HIDDEN], 0.0)      # ReLU(layer-1)
    s = a[:, HIDDEN:]                        # shortcut branch (no ReLU)

    # Stage 2: Linear(32, 32) + ReLU
    h = lax.dot_general(h, w2_ref[...], _DN_NT,
                        preferred_element_type=jnp.float32)
    h = jnp.maximum(h + b2_ref[...], 0.0)

    # Stage 3: Linear(32, 32) + ReLU
    h = lax.dot_general(h, w3_ref[...], _DN_NT,
                        preferred_element_type=jnp.float32)
    h = jnp.maximum(h + b3_ref[...], 0.0)

    o_ref[...] = (h + s).astype(o_ref.dtype)


def ff_global_forward(x, wa, ba, w2, b2, w3, b3):
    """x: (N, D_in); wa: (2*HIDDEN, D_in) = concat([W1, Ws], 0); ba: (1, 2*HIDDEN);
    w2, w3: (HIDDEN, HIDDEN); b2, b3: (1, HIDDEN). Weights in PyTorch (out, in) layout."""
    N = x.shape[0]
    vmem = pl.BlockSpec(memory_space=pltpu.MemorySpace.VMEM)
    return pl.pallas_call(
        ff_global_kernel,
        out_shape=jax.ShapeDtypeStruct((N, HIDDEN), jnp.float32),
        in_specs=[vmem] * 7,
        out_specs=vmem,
    )(x, wa, ba, w2, b2, w3, b3)


if __name__ == "__main__":
    key = jax.random.PRNGKey(0)
    ks = jax.random.split(key, 9)

    N, D_IN = 8, 32

    x = jax.random.normal(ks[0], (N, D_IN), dtype=jnp.float32)

    # Deterministic synthetic parameters in PyTorch Linear layout: W (out, in), b (out,)
    w1 = jax.random.normal(ks[1], (HIDDEN, D_IN), dtype=jnp.float32) * 0.1
    b1 = jax.random.normal(ks[2], (HIDDEN,), dtype=jnp.float32) * 0.1
    w2 = jax.random.normal(ks[3], (HIDDEN, HIDDEN), dtype=jnp.float32) * 0.1
    b2 = jax.random.normal(ks[4], (HIDDEN,), dtype=jnp.float32) * 0.1
    w3 = jax.random.normal(ks[5], (HIDDEN, HIDDEN), dtype=jnp.float32) * 0.1
    b3 = jax.random.normal(ks[6], (HIDDEN,), dtype=jnp.float32) * 0.1
    ws = jax.random.normal(ks[7], (HIDDEN, D_IN), dtype=jnp.float32) * 0.1
    bs = jax.random.normal(ks[8], (HIDDEN,), dtype=jnp.float32) * 0.1

    # One-time (outside the hot path) parameter fusion: layer-1 + shortcut weights
    # concatenated along the output dim; biases fused into one lane-dense row.
    wa = jnp.concatenate([w1, ws], axis=0)                  # (64, D_IN)
    ba = jnp.concatenate([b1, bs]).reshape(1, 2 * HIDDEN)   # (1, 64)

    out = ff_global_forward(
        x, wa, ba,
        w2, b2.reshape(1, HIDDEN),
        w3, b3.reshape(1, HIDDEN),
    )
    out = jax.block_until_ready(out)

    # Reference in plain JAX (same math as the PyTorch module).
    h = jnp.maximum(x @ w1.T + b1, 0.0)
    h = jnp.maximum(h @ w2.T + b2, 0.0)
    h = jnp.maximum(h @ w3.T + b3, 0.0)
    ref = h + (x @ ws.T + bs)
    assert jnp.allclose(out, ref, atol=1e-4, rtol=1e-4), "mismatch vs reference"

    print("KERNEL_OK")
</pallas_src>

<mosaic_0001>
module attributes {stable_mosaic.version = 11 : i64} {
  func.func @ff_global_kernel(%arg0: memref<8x32xf32, #tpu.memory_space<vmem>>, %arg1: memref<64x32xf32, #tpu.memory_space<vmem>>, %arg2: memref<1x64xf32, #tpu.memory_space<vmem>>, %arg3: memref<32x32xf32, #tpu.memory_space<vmem>>, %arg4: memref<1x32xf32, #tpu.memory_space<vmem>>, %arg5: memref<32x32xf32, #tpu.memory_space<vmem>>, %arg6: memref<1x32xf32, #tpu.memory_space<vmem>>, %arg7: memref<8x32xf32, #tpu.memory_space<vmem>>) attributes {dimension_semantics = [], scalar_prefetch = 0 : i64, scratch_operands = 0 : i64, tpu.core_type = #tpu.core_type<tc>} {
    %c0 = arith.constant 0 : index
    %c0_0 = arith.constant 0 : index
    %0 = vector.load %arg0[%c0, %c0_0] : memref<8x32xf32, #tpu.memory_space<vmem>>, vector<8x32xf32>
    %c0_1 = arith.constant 0 : index
    %c0_2 = arith.constant 0 : index
    %1 = vector.load %arg1[%c0_1, %c0_2] : memref<64x32xf32, #tpu.memory_space<vmem>>, vector<64x32xf32>
    %cst = arith.constant dense<0.000000e+00> : vector<8x64xf32>
    %2 = tpu.matmul %0, %1, %cst {dimension_numbers = #tpu.dot_dimension_numbers<[1], [1], [0], [0], [0, 0, 1, 0], [], []>} : vector<8x32xf32>, vector<64x32xf32>, vector<8x64xf32> -> vector<8x64xf32>
    %c0_3 = arith.constant 0 : index
    %c0_4 = arith.constant 0 : index
    %3 = vector.load %arg2[%c0_3, %c0_4] : memref<1x64xf32, #tpu.memory_space<vmem>>, vector<1x64xf32>
    %4 = vector.broadcast %3 : vector<1x64xf32> to vector<8x64xf32>
    %5 = arith.addf %2, %4 : vector<8x64xf32>
    %6 = vector.extract_strided_slice %5 {offsets = [0, 0], sizes = [8, 32], strides = [1, 1]} : vector<8x64xf32> to vector<8x32xf32>
    %cst_5 = arith.constant 0.000000e+00 : f32
    %7 = vector.broadcast %cst_5 : f32 to vector<8x32xf32>
    %8 = arith.maximumf %6, %7 : vector<8x32xf32>
    %9 = vector.extract_strided_slice %5 {offsets = [0, 32], sizes = [8, 32], strides = [1, 1]} : vector<8x64xf32> to vector<8x32xf32>
    %c0_6 = arith.constant 0 : index
    %c0_7 = arith.constant 0 : index
    %10 = vector.load %arg3[%c0_6, %c0_7] : memref<32x32xf32, #tpu.memory_space<vmem>>, vector<32x32xf32>
    %cst_8 = arith.constant dense<0.000000e+00> : vector<8x32xf32>
    %11 = tpu.matmul %8, %10, %cst_8 {dimension_numbers = #tpu.dot_dimension_numbers<[1], [1], [0], [0], [0, 0, 1, 0], [], []>} : vector<8x32xf32>, vector<32x32xf32>, vector<8x32xf32> -> vector<8x32xf32>
    %c0_9 = arith.constant 0 : index
    %c0_10 = arith.constant 0 : index
    %12 = vector.load %arg4[%c0_9, %c0_10] : memref<1x32xf32, #tpu.memory_space<vmem>>, vector<1x32xf32>
    %13 = vector.broadcast %12 : vector<1x32xf32> to vector<8x32xf32>
    %14 = arith.addf %11, %13 : vector<8x32xf32>
    %cst_11 = arith.constant 0.000000e+00 : f32
    %15 = vector.broadcast %cst_11 : f32 to vector<8x32xf32>
    %16 = arith.maximumf %14, %15 : vector<8x32xf32>
    %c0_12 = arith.constant 0 : index
    %c0_13 = arith.constant 0 : index
    %17 = vector.load %arg5[%c0_12, %c0_13] : memref<32x32xf32, #tpu.memory_space<vmem>>, vector<32x32xf32>
    %cst_14 = arith.constant dense<0.000000e+00> : vector<8x32xf32>
    %18 = tpu.matmul %16, %17, %cst_14 {dimension_numbers = #tpu.dot_dimension_numbers<[1], [1], [0], [0], [0, 0, 1, 0], [], []>} : vector<8x32xf32>, vector<32x32xf32>, vector<8x32xf32> -> vector<8x32xf32>
    %c0_15 = arith.constant 0 : index
    %c0_16 = arith.constant 0 : index
    %19 = vector.load %arg6[%c0_15, %c0_16] : memref<1x32xf32, #tpu.memory_space<vmem>>, vector<1x32xf32>
    %20 = vector.broadcast %19 : vector<1x32xf32> to vector<8x32xf32>
    %21 = arith.addf %18, %20 : vector<8x32xf32>
    %cst_17 = arith.constant 0.000000e+00 : f32
    %22 = vector.broadcast %cst_17 : f32 to vector<8x32xf32>
    %23 = arith.maximumf %21, %22 : vector<8x32xf32>
    %24 = arith.addf %23, %9 : vector<8x32xf32>
    %c0_18 = arith.constant 0 : index
    %c0_19 = arith.constant 0 : index
    %25 = vector.load %arg7[%c0_18, %c0_19] : memref<8x32xf32, #tpu.memory_space<vmem>>, vector<8x32xf32>
    tpu.vector_store %arg7[%c0_18, %c0_19], %24 {strides = array<i32>} : memref<8x32xf32, #tpu.memory_space<vmem>>, vector<8x32xf32>,
    return
  }
}

</mosaic_0001>

<llo_original>
// kernel: tpu_custom_call.1
$region0: #{tpu_custom_call.1}
  #allocation0 [shape = 'u32[]', space=smem, size = 0x4, offset = 0x4, fixed_abs, tag = 'smem constant byte address 0x4 - core index']
  #allocation1 [shape = 'u32[144,128]{1,0:T(1,128)}', space=vmem, size = 0x12000, scoped, tag = 'internal scratch']
  %s0 = inlined_call_operand.vmem [shape: f32[8,32], index: 0, kind: input, shape index: {}]
  %s1 = inlined_call_operand.vmem [shape: f32[64,32], index: 1, kind: input, shape index: {}]
  %s2 = inlined_call_operand.vmem [shape: f32[1,64], index: 2, kind: input, shape index: {}]
  %s3 = inlined_call_operand.vmem [shape: f32[32,32], index: 3, kind: input, shape index: {}]
  %s4 = inlined_call_operand.vmem [shape: f32[1,32], index: 4, kind: input, shape index: {}]
  %s5 = inlined_call_operand.vmem [shape: f32[32,32], index: 5, kind: input, shape index: {}]
  %s6 = inlined_call_operand.vmem [shape: f32[1,32], index: 6, kind: input, shape index: {}]
  %s7 = inlined_call_operand.hbm [shape: f32[8,32], index: 7, kind: output, shape index: {}]
  %s8 = sld [smem:[#allocation0]]
  $region38: #{tpu_custom_call.1} parent=0
    _
  %s10 = ssub.s32 1, %s8
  %s11 = scalar_select 0, %s10, %s8
  $region1: #{tpu_custom_call.1} parent=0
    #allocation2 [shape = 'u8[4096]{0}', space=vmem, size = 0x1000, scoped, tag = 'output window, operand 0, single buffered']
    #allocation3 [shape = 's32[1]{0}', space=sflag, size = 0x4, scoped, tag = 'scoped memory for tpu_custom_call.1']
    %12 = vsyncpa [#allocation3], 0
    // Predicated region
    $region2: #{tpu_custom_call.1} parent=1 // pred_check
      _
    $region3: #{tpu_custom_call.1} parent=1 // pred_check_branch
      %14 = sbr.rel (0) target = $region5
    $region4: #{tpu_custom_call.1} parent=1 // pred_region
      _
    $region5: #{tpu_custom_call.1} parent=1 // pred_fallthru
      _
    // Predicated region
    $region6: #{tpu_custom_call.1} parent=1 // pred_check
      _
    $region7: #{tpu_custom_call.1} parent=1 // pred_check_branch
      %16 = sbr.rel (0) target = $region9
    $region8: #{tpu_custom_call.1} parent=1 // pred_region
      _
    $region9: #{tpu_custom_call.1} parent=1 // pred_fallthru
      _
    // Predicated region
    $region10: #{tpu_custom_call.1} parent=1 // pred_check
      _
    $region11: #{tpu_custom_call.1} parent=1 // pred_check_branch
      %18 = sbr.rel (0) target = $region13
    $region12: #{tpu_custom_call.1} parent=1 // pred_region
      _
    $region13: #{tpu_custom_call.1} parent=1 // pred_fallthru
      _
    // Predicated region
    $region14: #{tpu_custom_call.1} parent=1 // pred_check
      _
    $region15: #{tpu_custom_call.1} parent=1 // pred_check_branch
      %20 = sbr.rel (0) target = $region17
    $region16: #{tpu_custom_call.1} parent=1 // pred_region
      _
    $region17: #{tpu_custom_call.1} parent=1 // pred_fallthru
      _
    // Predicated region
    $region18: #{tpu_custom_call.1} parent=1 // pred_check
      _
    $region19: #{tpu_custom_call.1} parent=1 // pred_check_branch
      %22 = sbr.rel (0) target = $region21
    $region20: #{tpu_custom_call.1} parent=1 // pred_region
      _
    $region21: #{tpu_custom_call.1} parent=1 // pred_fallthru
      _
    // Predicated region
    $region22: #{tpu_custom_call.1} parent=1 // pred_check
      _
    $region23: #{tpu_custom_call.1} parent=1 // pred_check_branch
      %24 = sbr.rel (0) target = $region25
    $region24: #{tpu_custom_call.1} parent=1 // pred_region
      _
    $region25: #{tpu_custom_call.1} parent=1 // pred_fallthru
      _
    // Predicated region
    $region26: #{tpu_custom_call.1} parent=1 // pred_check
      _
    $region27: #{tpu_custom_call.1} parent=1 // pred_check_branch
      %26 = sbr.rel (0) target = $region29
    $region28: #{tpu_custom_call.1} parent=1 // pred_region
      _
    $region29: #{tpu_custom_call.1} parent=1 // pred_fallthru
      _
    %v27 = vld [vmem:[%s0] sm:$0xff]
    %v28 = vld [vmem:[%s1] sm:$0xff]
    %v29 = vld [vmem:[%s1 + $0x8] sm:$0xff]
    %v30 = vld [vmem:[%s1 + $0x10] sm:$0xff]
    %v31 = vld [vmem:[%s1 + $0x18] sm:$0xff]
    %v32 = vld [vmem:[%s1 + $0x20] sm:$0xff]
    %v33 = vld [vmem:[%s1 + $0x28] sm:$0xff]
    %v34 = vld [vmem:[%s1 + $0x30] sm:$0xff]
    %v35 = vld [vmem:[%s1 + $0x38] sm:$0xff]
    %v36 = vld [vmem:[%s2] sm:$0x1]
    %v38 = vlaneseq
    %v39 = vshrl.u32 %v38, 7
    %v40 = vsub.s32 0, %v39
    %v41 = vrot.slane %v36, %v40
    %vm43 = vcmask 261120
    %v45 = vsel %vm43, %v27, 0
    %v48 = vsel %vm43, %v28, 0
    %v51 = vsel %vm43, %v29, 0
    %v54 = vsel %vm43, %v30, 0
    %v57 = vsel %vm43, %v31, 0
    %v60 = vsel %vm43, %v32, 0
    %v63 = vsel %vm43, %v33, 0
    %v66 = vsel %vm43, %v34, 0
    %v69 = vsel %vm43, %v35, 0
    %71 = vmatprep.subr.mxu0 0.0
    %72 = vmatpush1.xpose.msra.mxu0 %v48
    %73 = vmatprep.subr.mxu0 0.0
    %74 = vmatpush1.xpose.msra.mxu0 %v51
    %75 = vmatprep.subr.mxu0 0.0
    %76 = vmatpush1.xpose.msra.mxu0 %v54
    %77 = vmatprep.subr.mxu0 0.0
    %78 = vmatpush1.xpose.msra.mxu0 %v57
    %79 = vmatprep.subr.mxu0 0.0
    %80 = vmatpush1.xpose.msra.mxu0 %v60
    %81 = vmatprep.subr.mxu0 0.0
    %82 = vmatpush1.xpose.msra.mxu0 %v63
    %83 = vmatprep.subr.mxu0 0.0
    %84 = vmatpush1.xpose.msra.mxu0 %v66
    %85 = vmatprep.subr.mxu0 0.0
    %86 = vmatpush1.xpose.msra.mxu0 %v69
    %87 = vmatprep.subr.mxu0 0.0
    %88 = vmatpush1.xpose.msra.mxu0 0.0
    %89 = vmatprep.subr.mxu0 0.0
    %90 = vmatpush1.xpose.msra.mxu0 0.0
    %91 = vmatprep.subr.mxu0 0.0
    %92 = vmatpush1.xpose.msra.mxu0 0.0
    %93 = vmatprep.subr.mxu0 0.0
    %94 = vmatpush1.xpose.msra.mxu0 0.0
    %95 = vmatprep.subr.mxu0 0.0
    %96 = vmatpush1.xpose.msra.mxu0 0.0
    %97 = vmatprep.subr.mxu0 0.0
    %98 = vmatpush1.xpose.msra.mxu0 0.0
    %99 = vmatprep.subr.mxu0 0.0
    %100 = vmatpush1.xpose.msra.mxu0 0.0
    %101 = vmatprep.subr.mxu0 0.0
    %102 = vmatpush1.xpose.msra.mxu0 0.0
    %103 = vmatprep.subr.mxu0 0.0
    %104 = vmatpush1.xpose.msra.mxu0 0.0
    %105 = vmatprep.subr.mxu0 0.0
    %106 = vmatpush1.xpose.msra.mxu0 0.0
    %107 = vmatprep.subr.mxu0 0.0
    %108 = vmatpush1.xpose.msra.mxu0 0.0
    %109 = vmatprep.subr.mxu0 0.0
    %110 = vmatpush1.xpose.msra.mxu0 0.0
    %111 = vmatprep.subr.mxu0 0.0
    %112 = vmatpush1.xpose.msra.mxu0 0.0
    %113 = vmatprep.subr.mxu0 0.0
    %114 = vmatpush1.xpose.msra.mxu0 0.0
    %115 = vmatprep.subr.mxu0 0.0
    %116 = vmatpush1.xpose.msra.mxu0 0.0
    %117 = vmatprep.subr.mxu0 0.0
    %118 = vmatpush1.xpose.msra.mxu0 0.0
    %119 = vmatprep.subr.mxu0 0.0
    %120 = vmatpush1.xpose.msra.mxu0 0.0
    %121 = vmatprep.subr.mxu0 0.0
    %122 = vmatpush1.xpose.msra.mxu0 0.0
    %123 = vmatprep.subr.mxu0 0.0
    %124 = vmatpush1.xpose.msra.mxu0 0.0
    %125 = vmatprep.subr.mxu0 0.0
    %126 = vmatpush1.xpose.msra.mxu0 0.0
    %127 = vmatprep.subr.mxu0 0.0
    %128 = vmatpush1.xpose.msra.mxu0 0.0
    %129 = vmatprep.subr.mxu0 0.0
    %130 = vmatpush1.xpose.msra.mxu0 0.0
    %131 = vmatprep.subr.mxu0 0.0
    %132 = vmatpush1.xpose.msra.mxu0 0.0
    %133 = vmatprep.subr.mxu0 0.0
    %134 = vmatpush1.xpose.msra.mxu0 0.0
    %135 = vmatprep.mubr.f32.mxu0 0.0
    %136 = vmatmul.mubr.f32.gmra.mrb[0].mxu0 %v45
    %v137 = vpop.f32.mrb[0].mxu0
    %v138 = vadd.f32 %v41, %v137
    %v139 = vpop.f32.mrb[0].mxu0
    %140 = vdwg.mxu0
    %v141 = vmax.f32 %v138, 0.0
    %v142 = vld [vmem:[%s3] sm:$0xff]
    %v143 = vld [vmem:[%s3 + $0x8] sm:$0xff]
    %v144 = vld [vmem:[%s3 + $0x10] sm:$0xff]
    %v145 = vld [vmem:[%s3 + $0x18] sm:$0xff]
    %v146 = vld [vmem:[%s4] sm:$0x1]
    %v148 = vlaneseq
    %v149 = vshrl.u32 %v148, 7
    %v150 = vsub.s32 0, %v149
    %v151 = vrot.slane %v146, %v150
    %v154 = vsel %vm43, %v141, 0
    %v157 = vsel %vm43, %v142, 0
    %v160 = vsel %vm43, %v143, 0
    %v163 = vsel %vm43, %v144, 0
    %v166 = vsel %vm43, %v145, 0
    %168 = vmatprep.subr.mxu0 0.0
    %169 = vmatpush1.xpose.msra.mxu0 %v157
    %170 = vmatprep.subr.mxu0 0.0
    %171 = vmatpush1.xpose.msra.mxu0 %v160
    %172 = vmatprep.subr.mxu0 0.0
    %173 = vmatpush1.xpose.msra.mxu0 %v163
    %174 = vmatprep.subr.mxu0 0.0
    %175 = vmatpush1.xpose.msra.mxu0 %v166
    %176 = vmatprep.subr.mxu0 0.0
    %177 = vmatpush1.xpose.msra.mxu0 0.0
    %178 = vmatprep.subr.mxu0 0.0
    %179 = vmatpush1.xpose.msra.mxu0 0.0
    %180 = vmatprep.subr.mxu0 0.0
    %181 = vmatpush1.xpose.msra.mxu0 0.0
    %182 = vmatprep.subr.mxu0 0.0
    %183 = vmatpush1.xpose.msra.mxu0 0.0
    %184 = vmatprep.subr.mxu0 0.0
    %185 = vmatpush1.xpose.msra.mxu0 0.0
    %186 = vmatprep.subr.mxu0 0.0
    %187 = vmatpush1.xpose.msra.mxu0 0.0
    %188 = vmatprep.subr.mxu0 0.0
    %189 = vmatpush1.xpose.msra.mxu0 0.0
    %190 = vmatprep.subr.mxu0 0.0
    %191 = vmatpush1.xpose.msra.mxu0 0.0
    %192 = vmatprep.subr.mxu0 0.0
    %193 = vmatpush1.xpose.msra.mxu0 0.0
    %194 = vmatprep.subr.mxu0 0.0
    %195 = vmatpush1.xpose.msra.mxu0 0.0
    %196 = vmatprep.subr.mxu0 0.0
    %197 = vmatpush1.xpose.msra.mxu0 0.0
    %198 = vmatprep.subr.mxu0 0.0
    %199 = vmatpush1.xpose.msra.mxu0 0.0
    %200 = vmatprep.subr.mxu0 0.0
    %201 = vmatpush1.xpose.msra.mxu0 0.0
    %202 = vmatprep.subr.mxu0 0.0
    %203 = vmatpush1.xpose.msra.mxu0 0.0
    %204 = vmatprep.subr.mxu0 0.0
    %205 = vmatpush1.xpose.msra.mxu0 0.0
    %206 = vmatprep.subr.mxu0 0.0
    %207 = vmatpush1.xpose.msra.mxu0 0.0
    %208 = vmatprep.subr.mxu0 0.0
    %209 = vmatpush1.xpose.msra.mxu0 0.0
    %210 = vmatprep.subr.mxu0 0.0
    %211 = vmatpush1.xpose.msra.mxu0 0.0
    %212 = vmatprep.subr.mxu0 0.0
    %213 = vmatpush1.xpose.msra.mxu0 0.0
    %214 = vmatprep.subr.mxu0 0.0
    %215 = vmatpush1.xpose.msra.mxu0 0.0
    %216 = vmatprep.subr.mxu0 0.0
    %217 = vmatpush1.xpose.msra.mxu0 0.0
    %218 = vmatprep.subr.mxu0 0.0
    %219 = vmatpush1.xpose.msra.mxu0 0.0
    %220 = vmatprep.subr.mxu0 0.0
    %221 = vmatpush1.xpose.msra.mxu0 0.0
    %222 = vmatprep.subr.mxu0 0.0
    %223 = vmatpush1.xpose.msra.mxu0 0.0
    %224 = vmatprep.subr.mxu0 0.0
    %225 = vmatpush1.xpose.msra.mxu0 0.0
    %226 = vmatprep.subr.mxu0 0.0
    %227 = vmatpush1.xpose.msra.mxu0 0.0
    %228 = vmatprep.subr.mxu0 0.0
    %229 = vmatpush1.xpose.msra.mxu0 0.0
    %230 = vmatprep.subr.mxu0 0.0
    %231 = vmatpush1.xpose.msra.mxu0 0.0
    %232 = vmatprep.mubr.f32.mxu0 0.0
    %233 = vmatmul.mubr.f32.gmra.mrb[0].mxu0 %v154
    %v234 = vpop.f32.mrb[0].mxu0
    %v235 = vadd.f32 %v151, %v234
    %v236 = vpop.f32.mrb[0].mxu0
    %237 = vdwg.mxu0
    %v238 = vmax.f32 %v235, 0.0
    %v239 = vld [vmem:[%s5] sm:$0xff]
    %v240 = vld [vmem:[%s5 + $0x8] sm:$0xff]
    %v241 = vld [vmem:[%s5 + $0x10] sm:$0xff]
    %v242 = vld [vmem:[%s5 + $0x18] sm:$0xff]
    %v243 = vld [vmem:[%s6] sm:$0x1]
    %v245 = vlaneseq
    %v246 = vshrl.u32 %v245, 7
    %v247 = vsub.s32 0, %v246
    %v248 = vrot.slane %v243, %v247
    %v251 = vsel %vm43, %v238, 0
    %v254 = vsel %vm43, %v239, 0
    %v257 = vsel %vm43, %v240, 0
    %v260 = vsel %vm43, %v241, 0
    %v263 = vsel %vm43, %v242, 0
    %265 = vmatprep.subr.mxu0 0.0
    %266 = vmatpush1.xpose.msra.mxu0 %v254
    %267 = vmatprep.subr.mxu0 0.0
    %268 = vmatpush1.xpose.msra.mxu0 %v257
    %269 = vmatprep.subr.mxu0 0.0
    %270 = vmatpush1.xpose.msra.mxu0 %v260
    %271 = vmatprep.subr.mxu0 0.0
    %272 = vmatpush1.xpose.msra.mxu0 %v263
    %273 = vmatprep.subr.mxu0 0.0
    %274 = vmatpush1.xpose.msra.mxu0 0.0
    %275 = vmatprep.subr.mxu0 0.0
    %276 = vmatpush1.xpose.msra.mxu0 0.0
    %277 = vmatprep.subr.mxu0 0.0
    %278 = vmatpush1.xpose.msra.mxu0 0.0
    %279 = vmatprep.subr.mxu0 0.0
    %280 = vmatpush1.xpose.msra.mxu0 0.0
    %281 = vmatprep.subr.mxu0 0.0
    %282 = vmatpush1.xpose.msra.mxu0 0.0
    %283 = vmatprep.subr.mxu0 0.0
    %284 = vmatpush1.xpose.msra.mxu0 0.0
    %285 = vmatprep.subr.mxu0 0.0
    %286 = vmatpush1.xpose.msra.mxu0 0.0
    %287 = vmatprep.subr.mxu0 0.0
    %288 = vmatpush1.xpose.msra.mxu0 0.0
    %289 = vmatprep.subr.mxu0 0.0
    %290 = vmatpush1.xpose.msra.mxu0 0.0
    %291 = vmatprep.subr.mxu0 0.0
    %292 = vmatpush1.xpose.msra.mxu0 0.0
    %293 = vmatprep.subr.mxu0 0.0
    %294 = vmatpush1.xpose.msra.mxu0 0.0
    %295 = vmatprep.subr.mxu0 0.0
    %296 = vmatpush1.xpose.msra.mxu0 0.0
    %297 = vmatprep.subr.mxu0 0.0
    %298 = vmatpush1.xpose.msra.mxu0 0.0
    %299 = vmatprep.subr.mxu0 0.0
    %300 = vmatpush1.xpose.msra.mxu0 0.0
    %301 = vmatprep.subr.mxu0 0.0
    %302 = vmatpush1.xpose.msra.mxu0 0.0
    %303 = vmatprep.subr.mxu0 0.0
    %304 = vmatpush1.xpose.msra.mxu0 0.0
    %305 = vmatprep.subr.mxu0 0.0
    %306 = vmatpush1.xpose.msra.mxu0 0.0
    %307 = vmatprep.subr.mxu0 0.0
    %308 = vmatpush1.xpose.msra.mxu0 0.0
    %309 = vmatprep.subr.mxu0 0.0
    %310 = vmatpush1.xpose.msra.mxu0 0.0
    %311 = vmatprep.subr.mxu0 0.0
    %312 = vmatpush1.xpose.msra.mxu0 0.0
    %313 = vmatprep.subr.mxu0 0.0
    %314 = vmatpush1.xpose.msra.mxu0 0.0
    %315 = vmatprep.subr.mxu0 0.0
    %316 = vmatpush1.xpose.msra.mxu0 0.0
    %317 = vmatprep.subr.mxu0 0.0
    %318 = vmatpush1.xpose.msra.mxu0 0.0
    %319 = vmatprep.subr.mxu0 0.0
    %320 = vmatpush1.xpose.msra.mxu0 0.0
    %321 = vmatprep.subr.mxu0 0.0
    %322 = vmatpush1.xpose.msra.mxu0 0.0
    %323 = vmatprep.subr.mxu0 0.0
    %324 = vmatpush1.xpose.msra.mxu0 0.0
    %325 = vmatprep.subr.mxu0 0.0
    %326 = vmatpush1.xpose.msra.mxu0 0.0
    %327 = vmatprep.subr.mxu0 0.0
    %328 = vmatpush1.xpose.msra.mxu0 0.0
    %329 = vmatprep.mubr.f32.mxu0 0.0
    %330 = vmatmul.mubr.f32.gmra.mrb[0].mxu0 %v251
    %v331 = vpop.f32.mrb[0].mxu0
    %v332 = vadd.f32 %v248, %v331
    %v333 = vpop.f32.mrb[0].mxu0
    %334 = vdwg.mxu0
    %v335 = vmax.f32 %v332, 0.0
    %337 = vrot.lane.b32.xlu0 %v138, 96
    %v338 = vpop.permute.xlu0 %337
    %v340 = vadd.f32 %v335, %v338
    %341 = vst.msk [vmem:[#allocation2] sm:$0xff] %vm43, %v340
    // Predicated region
    $region30: #{tpu_custom_call.1} parent=1 // pred_check
      _
    $region31: #{tpu_custom_call.1} parent=1 // pred_check_branch
      %343 = sbr.rel (0) target = $region33
    $region32: #{tpu_custom_call.1} parent=1 // pred_region
      %s345 = ssub.s32 128, 128
      %346 = vsyncadd [#allocation3], %s345
      %s348 = sshll.u32 [#allocation2], 4
      %s349 = int_to_ptr.vmem [resolvable:$true] %s348
      %351 = dma.vmem_to_hbm [thread:$0]  %s349, 128, %s7, [#allocation3]
    $region33: #{tpu_custom_call.1} parent=1 // pred_fallthru
      _
    // Predicated region
    $region34: #{tpu_custom_call.1} parent=1 // pred_check
      _
    $region35: #{tpu_custom_call.1} parent=1 // pred_check_branch
      %353 = sbr.rel (0) target = $region37
    $region36: #{tpu_custom_call.1} parent=1 // pred_region
      %354 = dma.done [#allocation3], 128
    $region37: #{tpu_custom_call.1} parent=1 // pred_fallthru
      _
    %355 = vsyncpa [#allocation3], 1

</llo_original>
